<compile_context>
chip_gen: v6e
topology: v6e:2x2x1
jax: 0.10.0
libtpu: 0.0.40
codegen_flags: <defaults>
</compile_context>

<pallas_src>
import functools

import jax
import jax.numpy as jnp
from jax.experimental import pallas as pl
from jax.experimental.pallas import tpu as pltpu


def _round_up(n, m):
    return ((n + m - 1) // m) * m


def _mlp_head_kernel(x_ref,
                     w1_ref, b1_ref,
                     w2_ref, b2_ref,
                     w3_ref, b3_ref,
                     w4d_ref, b4d_ref,
                     o_ref):
    """Fused 4-layer MLP + 2-class softmax (sigmoid form) on one batch tile."""
    x = x_ref[...]

    h = jnp.dot(x, w1_ref[...], preferred_element_type=jnp.float32) + b1_ref[...]
    h = jnp.maximum(h, 0.0)

    h = jnp.dot(h, w2_ref[...], preferred_element_type=jnp.float32) + b2_ref[...]
    h = jnp.maximum(h, 0.0)

    h = jnp.dot(h, w3_ref[...], preferred_element_type=jnp.float32) + b3_ref[...]
    h = jnp.maximum(h, 0.0)

    # Logit difference z1 - z0 via pre-folded weight/bias difference: (T, 1).
    d = jnp.dot(h, w4d_ref[...], preferred_element_type=jnp.float32) + b4d_ref[...]

    # softmax([z0, z1]) == [1 - sigmoid(z1 - z0), sigmoid(z1 - z0)]  (exact).
    p1 = jax.nn.sigmoid(d)                                   # (T, 1), VPU + EUP only
    lane = jax.lax.broadcasted_iota(jnp.int32, o_ref.shape, 1)
    o_ref[...] = jnp.where(lane == 1, p1, 1.0 - p1).astype(o_ref.dtype)


@functools.partial(jax.jit, static_argnames=("batch_tile",))
def ported_mlp_classifier(x, params, *, batch_tile=1024):
    """PortedMLPClassifier forward (default path) via a fused Pallas kernel.

    x: (B, 37) float32 (any B; padded internally to a multiple of the tile).
    params: dict with w1..w4 of shape (in, out) and b1..b4 of shape (1, out).
    returns: (B, 2) softmax probabilities.
    """
    B, n_in = x.shape
    n_out = params["w4"].shape[1]
    assert n_out == 2, "fused kernel specialises the 2-class softmax head"

    # Effective tile: big enough to hide per-step overhead, clamped for tiny
    # batches. Multiple of 8 sublanes always; large batches get `batch_tile`.
    tile = min(_round_up(batch_tile, 8), _round_up(max(B, 1), 8))
    Bp = _round_up(B, tile)
    if Bp != B:
        x = jnp.pad(x, ((0, Bp - B), (0, 0)))

    # Fold the last layer into a single logit-difference column (z1 - z0).
    w4d = params["w4"][:, 1:2] - params["w4"][:, 0:1]        # (8, 1)
    b4d = params["b4"][:, 1:2] - params["b4"][:, 0:1]        # (1, 1)

    # Weights/biases are tiny (<8 KB total): single full-array blocks with a
    # constant index_map -> VMEM-resident across all grid steps.
    def full_spec(a):
        return pl.BlockSpec(a.shape, lambda i: tuple(0 for _ in a.shape))

    grid = (Bp // tile,)

    out = pl.pallas_call(
        _mlp_head_kernel,
        out_shape=jax.ShapeDtypeStruct((Bp, n_out), jnp.float32),
        grid_spec=pltpu.PrefetchScalarGridSpec(
            num_scalar_prefetch=0,
            grid=grid,
            in_specs=[
                pl.BlockSpec((tile, n_in), lambda i: (i, 0)),
                full_spec(params["w1"]), full_spec(params["b1"]),
                full_spec(params["w2"]), full_spec(params["b2"]),
                full_spec(params["w3"]), full_spec(params["b3"]),
                full_spec(w4d), full_spec(b4d),
            ],
            out_specs=pl.BlockSpec((tile, n_out), lambda i: (i, 0)),
        ),
        # Batch axis is independent -> "parallel" lets v7x shard it across
        # both TensorCores (keep >=2 grid steps for large batches).
        compiler_params=pltpu.CompilerParams(
            dimension_semantics=("parallel",)),
    )(x,
      params["w1"], params["b1"],
      params["w2"], params["b2"],
      params["w3"], params["b3"],
      w4d, b4d)

    return out[:B]


def init_params(key, n_in=37, n_out=2):
    """Deterministic init mirroring nn.Linear default (uniform +-1/sqrt(fan_in))."""
    dims = [(n_in, 32), (32, 16), (16, 8), (8, n_out)]
    params = {}
    keys = jax.random.split(key, 2 * len(dims))
    for idx, (fan_in, fan_out) in enumerate(dims):
        bound = 1.0 / jnp.sqrt(jnp.float32(fan_in))
        params[f"w{idx + 1}"] = jax.random.uniform(
            keys[2 * idx], (fan_in, fan_out), jnp.float32, -bound, bound)
        params[f"b{idx + 1}"] = jax.random.uniform(
            keys[2 * idx + 1], (1, fan_out), jnp.float32, -bound, bound)
    return params


def _reference(x, p):
    h = jax.nn.relu(x @ p["w1"] + p["b1"])
    h = jax.nn.relu(h @ p["w2"] + p["b2"])
    h = jax.nn.relu(h @ p["w3"] + p["b3"])
    z = h @ p["w4"] + p["b4"]
    return jax.nn.softmax(z, axis=1)


if __name__ == "__main__":
    key = jax.random.PRNGKey(0)
    k_params, k_x = jax.random.split(key)

    n_in, n_out = 37, 2
    batch = 13  # deliberately NOT a multiple of 8 to exercise the padding path

    params = init_params(k_params, n_in=n_in, n_out=n_out)
    x = jax.random.normal(k_x, (batch, n_in), jnp.float32)

    out = ported_mlp_classifier(x, params)
    out = jax.block_until_ready(out)

    ref = _reference(x, params)
    assert out.shape == (batch, n_out)
    assert jnp.allclose(out, ref, atol=1e-5, rtol=1e-5), "mismatch vs JAX reference"
    # rows sum to 1 (softmax)
    assert jnp.allclose(jnp.sum(out, axis=1), jnp.ones((batch,)), atol=1e-5)

    # TODO(synk): latent=/get_all= debug paths (returning intermediate ReLU
    # activations) are not fused; only the default predict_proba path is.

    print("KERNEL_OK")
</pallas_src>

<mosaic_0001>
module attributes {stable_mosaic.version = 11 : i64} {
  func.func @_mlp_head_kernel(%arg0: i32, %arg1: memref<16x37xf32, #tpu.memory_space<vmem>>, %arg2: memref<37x32xf32, #tpu.memory_space<vmem>>, %arg3: memref<1x32xf32, #tpu.memory_space<vmem>>, %arg4: memref<32x16xf32, #tpu.memory_space<vmem>>, %arg5: memref<1x16xf32, #tpu.memory_space<vmem>>, %arg6: memref<16x8xf32, #tpu.memory_space<vmem>>, %arg7: memref<1x8xf32, #tpu.memory_space<vmem>>, %arg8: memref<8x1xf32, #tpu.memory_space<vmem>>, %arg9: memref<1x1xf32, #tpu.memory_space<vmem>>, %arg10: memref<16x2xf32, #tpu.memory_space<vmem>>) attributes {dimension_semantics = [#tpu.dimension_semantics<parallel>], iteration_bounds = array<i64: 1>, scalar_prefetch = 0 : i64, scratch_operands = 0 : i64, tpu.core_type = #tpu.core_type<tc>, window_params = [{transform_indices = @transform_0, window_bounds = array<i64: 16, 37>}, {pipeline_mode = #tpu.pipeline_mode<synchronous>, transform_indices = @transform_1, window_bounds = array<i64: 37, 32>}, {pipeline_mode = #tpu.pipeline_mode<synchronous>, transform_indices = @transform_2, window_bounds = array<i64: 1, 32>}, {pipeline_mode = #tpu.pipeline_mode<synchronous>, transform_indices = @transform_3, window_bounds = array<i64: 32, 16>}, {pipeline_mode = #tpu.pipeline_mode<synchronous>, transform_indices = @transform_4, window_bounds = array<i64: 1, 16>}, {pipeline_mode = #tpu.pipeline_mode<synchronous>, transform_indices = @transform_5, window_bounds = array<i64: 16, 8>}, {pipeline_mode = #tpu.pipeline_mode<synchronous>, transform_indices = @transform_6, window_bounds = array<i64: 1, 8>}, {pipeline_mode = #tpu.pipeline_mode<synchronous>, transform_indices = @transform_7, window_bounds = array<i64: 8, 1>}, {pipeline_mode = #tpu.pipeline_mode<synchronous>, transform_indices = @transform_8, window_bounds = array<i64: 1, 1>}, {transform_indices = @transform_9, window_bounds = array<i64: 16, 2>}]} {
    %c0 = arith.constant 0 : index
    %c0_0 = arith.constant 0 : index
    %0 = vector.load %arg1[%c0, %c0_0] : memref<16x37xf32, #tpu.memory_space<vmem>>, vector<16x37xf32>
    %c0_1 = arith.constant 0 : index
    %c0_2 = arith.constant 0 : index
    %1 = vector.load %arg2[%c0_1, %c0_2] : memref<37x32xf32, #tpu.memory_space<vmem>>, vector<37x32xf32>
    %cst = arith.constant dense<0.000000e+00> : vector<16x32xf32>
    %2 = tpu.matmul %0, %1, %cst {dimension_numbers = #tpu.dot_dimension_numbers<[1], [0], [0], [1], [0, 0, 1, 1], [], []>} : vector<16x37xf32>, vector<37x32xf32>, vector<16x32xf32> -> vector<16x32xf32>
    %c0_3 = arith.constant 0 : index
    %c0_4 = arith.constant 0 : index
    %3 = vector.load %arg3[%c0_3, %c0_4] : memref<1x32xf32, #tpu.memory_space<vmem>>, vector<1x32xf32>
    %4 = vector.broadcast %3 : vector<1x32xf32> to vector<16x32xf32>
    %5 = arith.addf %2, %4 : vector<16x32xf32>
    %cst_5 = arith.constant 0.000000e+00 : f32
    %6 = vector.broadcast %cst_5 : f32 to vector<16x32xf32>
    %7 = arith.maximumf %5, %6 : vector<16x32xf32>
    %c0_6 = arith.constant 0 : index
    %c0_7 = arith.constant 0 : index
    %8 = vector.load %arg4[%c0_6, %c0_7] : memref<32x16xf32, #tpu.memory_space<vmem>>, vector<32x16xf32>
    %cst_8 = arith.constant dense<0.000000e+00> : vector<16x16xf32>
    %9 = tpu.matmul %7, %8, %cst_8 {dimension_numbers = #tpu.dot_dimension_numbers<[1], [0], [0], [1], [0, 0, 1, 1], [], []>} : vector<16x32xf32>, vector<32x16xf32>, vector<16x16xf32> -> vector<16x16xf32>
    %c0_9 = arith.constant 0 : index
    %c0_10 = arith.constant 0 : index
    %10 = vector.load %arg5[%c0_9, %c0_10] : memref<1x16xf32, #tpu.memory_space<vmem>>, vector<1x16xf32>
    %11 = vector.broadcast %10 : vector<1x16xf32> to vector<16x16xf32>
    %12 = arith.addf %9, %11 : vector<16x16xf32>
    %cst_11 = arith.constant 0.000000e+00 : f32
    %13 = vector.broadcast %cst_11 : f32 to vector<16x16xf32>
    %14 = arith.maximumf %12, %13 : vector<16x16xf32>
    %c0_12 = arith.constant 0 : index
    %c0_13 = arith.constant 0 : index
    %15 = vector.load %arg6[%c0_12, %c0_13] : memref<16x8xf32, #tpu.memory_space<vmem>>, vector<16x8xf32>
    %cst_14 = arith.constant dense<0.000000e+00> : vector<16x8xf32>
    %16 = tpu.matmul %14, %15, %cst_14 {dimension_numbers = #tpu.dot_dimension_numbers<[1], [0], [0], [1], [0, 0, 1, 1], [], []>} : vector<16x16xf32>, vector<16x8xf32>, vector<16x8xf32> -> vector<16x8xf32>
    %c0_15 = arith.constant 0 : index
    %c0_16 = arith.constant 0 : index
    %17 = vector.load %arg7[%c0_15, %c0_16] : memref<1x8xf32, #tpu.memory_space<vmem>>, vector<1x8xf32>
    %18 = vector.broadcast %17 : vector<1x8xf32> to vector<16x8xf32>
    %19 = arith.addf %16, %18 : vector<16x8xf32>
    %cst_17 = arith.constant 0.000000e+00 : f32
    %20 = vector.broadcast %cst_17 : f32 to vector<16x8xf32>
    %21 = arith.maximumf %19, %20 : vector<16x8xf32>
    %c0_18 = arith.constant 0 : index
    %c0_19 = arith.constant 0 : index
    %22 = vector.load %arg8[%c0_18, %c0_19] : memref<8x1xf32, #tpu.memory_space<vmem>>, vector<8x1xf32>
    %cst_20 = arith.constant dense<0.000000e+00> : vector<16x1xf32>
    %23 = tpu.matmul %21, %22, %cst_20 {dimension_numbers = #tpu.dot_dimension_numbers<[1], [0], [0], [1], [0, 0, 1, 1], [], []>} : vector<16x8xf32>, vector<8x1xf32>, vector<16x1xf32> -> vector<16x1xf32>
    %c0_21 = arith.constant 0 : index
    %c0_22 = arith.constant 0 : index
    %24 = vector.load %arg9[%c0_21, %c0_22] : memref<1x1xf32, #tpu.memory_space<vmem>>, vector<1x1xf32>
    %25 = vector.broadcast %24 : vector<1x1xf32> to vector<16x1xf32>
    %26 = arith.addf %23, %25 : vector<16x1xf32>
    %27 = arith.negf %26 : vector<16x1xf32>
    %28 = math.exp %27 : vector<16x1xf32>
    %cst_23 = arith.constant 1.000000e+00 : f32
    %29 = vector.broadcast %cst_23 : f32 to vector<16x1xf32>
    %30 = arith.addf %29, %28 : vector<16x1xf32>
    %31 = arith.divf %29, %30 : vector<16x1xf32>
    %32 = tpu.iota {dimensions = array<i32: 1>} : vector<16x2xi32>
    %c1_i32 = arith.constant 1 : i32
    %33 = vector.broadcast %c1_i32 : i32 to vector<16x2xi32>
    %34 = arith.cmpi eq, %32, %33 : vector<16x2xi32>
    %cst_24 = arith.constant 1.000000e+00 : f32
    %35 = vector.broadcast %cst_24 : f32 to vector<16x1xf32>
    %36 = arith.subf %35, %31 : vector<16x1xf32>
    %37 = vector.shape_cast %31 : vector<16x1xf32> to vector<16x1xf32>
    %38 = vector.broadcast %37 : vector<16x1xf32> to vector<16x2xf32>
    %39 = vector.shape_cast %36 : vector<16x1xf32> to vector<16x1xf32>
    %40 = vector.broadcast %39 : vector<16x1xf32> to vector<16x2xf32>
    %41 = arith.select %34, %38, %40 : vector<16x2xi1>, vector<16x2xf32>
    %c0_25 = arith.constant 0 : index
    %c0_26 = arith.constant 0 : index
    %42 = vector.load %arg10[%c0_25, %c0_26] : memref<16x2xf32, #tpu.memory_space<vmem>>, vector<16x2xf32>
    tpu.vector_store %arg10[%c0_25, %c0_26], %41 {strides = array<i32>} : memref<16x2xf32, #tpu.memory_space<vmem>>, vector<16x2xf32>,
    return
  }
  func.func @transform_0(%arg0: i32) -> (i32, i32) {
    %c0_i32 = arith.constant 0 : i32
    %c0_i32_0 = arith.constant 0 : i32
    return %arg0, %c0_i32 : i32, i32
  }
  func.func @transform_1(%arg0: i32) -> (i32, i32) {
    %c0_i32 = arith.constant 0 : i32
    %c0_i32_0 = arith.constant 0 : i32
    %c0_i32_1 = arith.constant 0 : i32
    return %c0_i32, %c0_i32_0 : i32, i32
  }
  func.func @transform_2(%arg0: i32) -> (i32, i32) {
    %c0_i32 = arith.constant 0 : i32
    %c0_i32_0 = arith.constant 0 : i32
    %c0_i32_1 = arith.constant 0 : i32
    return %c0_i32, %c0_i32_0 : i32, i32
  }
  func.func @transform_3(%arg0: i32) -> (i32, i32) {
    %c0_i32 = arith.constant 0 : i32
    %c0_i32_0 = arith.constant 0 : i32
    %c0_i32_1 = arith.constant 0 : i32
    return %c0_i32, %c0_i32_0 : i32, i32
  }
  func.func @transform_4(%arg0: i32) -> (i32, i32) {
    %c0_i32 = arith.constant 0 : i32
    %c0_i32_0 = arith.constant 0 : i32
    %c0_i32_1 = arith.constant 0 : i32
    return %c0_i32, %c0_i32_0 : i32, i32
  }
  func.func @transform_5(%arg0: i32) -> (i32, i32) {
    %c0_i32 = arith.constant 0 : i32
    %c0_i32_0 = arith.constant 0 : i32
    %c0_i32_1 = arith.constant 0 : i32
    return %c0_i32, %c0_i32_0 : i32, i32
  }
  func.func @transform_6(%arg0: i32) -> (i32, i32) {
    %c0_i32 = arith.constant 0 : i32
    %c0_i32_0 = arith.constant 0 : i32
    %c0_i32_1 = arith.constant 0 : i32
    return %c0_i32, %c0_i32_0 : i32, i32
  }
  func.func @transform_7(%arg0: i32) -> (i32, i32) {
    %c0_i32 = arith.constant 0 : i32
    %c0_i32_0 = arith.constant 0 : i32
    %c0_i32_1 = arith.constant 0 : i32
    return %c0_i32, %c0_i32_0 : i32, i32
  }
  func.func @transform_8(%arg0: i32) -> (i32, i32) {
    %c0_i32 = arith.constant 0 : i32
    %c0_i32_0 = arith.constant 0 : i32
    %c0_i32_1 = arith.constant 0 : i32
    return %c0_i32, %c0_i32_0 : i32, i32
  }
  func.func @transform_9(%arg0: i32) -> (i32, i32) {
    %c0_i32 = arith.constant 0 : i32
    %c0_i32_0 = arith.constant 0 : i32
    return %arg0, %c0_i32 : i32, i32
  }
}

</mosaic_0001>

<llo_original>
// kernel: sub.2
$region0: #{sub.2}
  #allocation0 [shape = 's32[1]{0}', space=sflag, size = 0x4, scoped, tag = 'scoped memory for sub.2']
  %s0 = inlined_call_operand.vmem [shape: f32[8,1], index: 0, kind: input, shape index: {}]
  %s1 = inlined_call_operand.vmem [shape: f32[8,1], index: 1, kind: input, shape index: {}]
  %s2 = inlined_call_operand.vmem [shape: f32[8,1], index: 2, kind: output, shape index: {}]
  %v3 = vld [vmem:[%s0] sm:$0xff]
  %v4 = vld [vmem:[%s1] sm:$0xff]
  %5 = xla_tuple %v3, %v4
  %6 = xla_tuple %5
  %v7 = vsub.f32 %v3, %v4
  %8 = xla_tuple %v7
  %9 = vst [vmem:[%s2] sm:$0xff] %v7

// kernel: ported_mlp_classifier.1
$region0: #{ported_mlp_classifier.1}
  #allocation0 [shape = 'u32[]', space=smem, size = 0x4, offset = 0x4, fixed_abs, tag = 'smem constant byte address 0x4 - core index']
  #allocation1 [shape = 'u32[144,128]{1,0:T(1,128)}', space=vmem, size = 0x12000, scoped, tag = 'internal scratch']
  #allocation2 [shape = 'f32[1,1]{1,0:T(1,128)S(1)}', space=vmem, size = 0x200, scoped, tag = 'scoped memory for ported_mlp_classifier.1']
  %s0 = inlined_call_operand.vmem [shape: f32[16,37], index: 0, kind: input, shape index: {}]
  %s1 = inlined_call_operand.vmem [shape: f32[37,32], index: 1, kind: input, shape index: {}]
  %s2 = inlined_call_operand.vmem [shape: f32[1,32], index: 2, kind: input, shape index: {}]
  %s3 = inlined_call_operand.vmem [shape: f32[32,16], index: 3, kind: input, shape index: {}]
  %s4 = inlined_call_operand.vmem [shape: f32[1,16], index: 4, kind: input, shape index: {}]
  %s5 = inlined_call_operand.vmem [shape: f32[16,8], index: 5, kind: input, shape index: {}]
  %s6 = inlined_call_operand.vmem [shape: f32[1,8], index: 6, kind: input, shape index: {}]
  %s7 = inlined_call_operand.vmem [shape: f32[8,1], index: 7, kind: input, shape index: {}]
  %s8 = inlined_call_operand.<no memory space> [shape: f32[1,1], index: 8, kind: input, shape index: {}]
  %s9 = inlined_call_operand.vmem [shape: f32[16,2], index: 9, kind: output, shape index: {}]
  %s10 = sld [smem:[#allocation0]]
  $region46: #{ported_mlp_classifier.1} parent=0
    _
  %s12 = ssub.s32 1, %s10
  %s13 = scalar_select 0, %s12, %s10
  %v14 = vstv %s8
  %15 = vst [vmem:[#allocation2] sm:$0x1] %v14
  // Predicated region
  $region2: #{ported_mlp_classifier.1} parent=0 // pred_check
    _
  $region3: #{ported_mlp_classifier.1} parent=0 // pred_check_branch
    %17 = sbr.rel (0) target = $region5
  $region4: #{ported_mlp_classifier.1} parent=0 // pred_region
    _
  $region5: #{ported_mlp_classifier.1} parent=0 // pred_fallthru
    _
  // Predicated region
  $region6: #{ported_mlp_classifier.1} parent=0 // pred_check
    _
  $region7: #{ported_mlp_classifier.1} parent=0 // pred_check_branch
    %19 = sbr.rel (0) target = $region9
  $region8: #{ported_mlp_classifier.1} parent=0 // pred_region
    _
  $region9: #{ported_mlp_classifier.1} parent=0 // pred_fallthru
    _
  // Predicated region
  $region10: #{ported_mlp_classifier.1} parent=0 // pred_check
    _
  $region11: #{ported_mlp_classifier.1} parent=0 // pred_check_branch
    %21 = sbr.rel (0) target = $region13
  $region12: #{ported_mlp_classifier.1} parent=0 // pred_region
    _
  $region13: #{ported_mlp_classifier.1} parent=0 // pred_fallthru
    _
  // Predicated region
  $region14: #{ported_mlp_classifier.1} parent=0 // pred_check
    _
  $region15: #{ported_mlp_classifier.1} parent=0 // pred_check_branch
    %23 = sbr.rel (0) target = $region17
  $region16: #{ported_mlp_classifier.1} parent=0 // pred_region
    _
  $region17: #{ported_mlp_classifier.1} parent=0 // pred_fallthru
    _
  // Predicated region
  $region18: #{ported_mlp_classifier.1} parent=0 // pred_check
    _
  $region19: #{ported_mlp_classifier.1} parent=0 // pred_check_branch
    %25 = sbr.rel (0) target = $region21
  $region20: #{ported_mlp_classifier.1} parent=0 // pred_region
    _
  $region21: #{ported_mlp_classifier.1} parent=0 // pred_fallthru
    _
  // Predicated region
  $region22: #{ported_mlp_classifier.1} parent=0 // pred_check
    _
  $region23: #{ported_mlp_classifier.1} parent=0 // pred_check_branch
    %27 = sbr.rel (0) target = $region25
  $region24: #{ported_mlp_classifier.1} parent=0 // pred_region
    _
  $region25: #{ported_mlp_classifier.1} parent=0 // pred_fallthru
    _
  // Predicated region
  $region26: #{ported_mlp_classifier.1} parent=0 // pred_check
    _
  $region27: #{ported_mlp_classifier.1} parent=0 // pred_check_branch
    %29 = sbr.rel (0) target = $region29
  $region28: #{ported_mlp_classifier.1} parent=0 // pred_region
    _
  $region29: #{ported_mlp_classifier.1} parent=0 // pred_fallthru
    _
  // Predicated region
  $region30: #{ported_mlp_classifier.1} parent=0 // pred_check
    _
  $region31: #{ported_mlp_classifier.1} parent=0 // pred_check_branch
    %31 = sbr.rel (0) target = $region33
  $region32: #{ported_mlp_classifier.1} parent=0 // pred_region
    _
  $region33: #{ported_mlp_classifier.1} parent=0 // pred_fallthru
    _
  // Predicated region
  $region34: #{ported_mlp_classifier.1} parent=0 // pred_check
    _
  $region35: #{ported_mlp_classifier.1} parent=0 // pred_check_branch
    %33 = sbr.rel (0) target = $region37
  $region36: #{ported_mlp_classifier.1} parent=0 // pred_region
    _
  $region37: #{ported_mlp_classifier.1} parent=0 // pred_fallthru
    _
  %v34 = vld [vmem:[%s0] sm:$0xff]
  %v35 = vld [vmem:[%s0 + $0x8] sm:$0xff]
  %v36 = vld [vmem:[%s1] sm:$0xff]
  %v37 = vld [vmem:[%s1 + $0x8] sm:$0xff]
  %v38 = vld [vmem:[%s1 + $0x10] sm:$0xff]
  %v39 = vld [vmem:[%s1 + $0x18] sm:$0xff]
  %v40 = vld [vmem:[%s1 + $0x20] sm:$0x1f]
  %v41 = vld [vmem:[%s2] sm:$0x1]
  %v43 = vlaneseq
  %v44 = vshrl.u32 %v43, 7
  %v45 = vsub.s32 0, %v44
  %v46 = vrot.slane %v41, %v45
  %vm48 = vcmask 302080
  %v50 = vsel %vm48, %v34, 0
  %v53 = vsel %vm48, %v35, 0
  %vm55 = vcmask 1044480
  %v57 = vsel %vm55, %v40, 0
  %59 = vmatprep.subr.mxu0 0.0
  %60 = vmatpush1.msra.mxu0 0.0
  %61 = vmatprep.subr.mxu0 0.0
  %62 = vmatpush1.msra.mxu0 0.0
  %63 = vmatprep.subr.mxu0 0.0
  %64 = vmatpush1.msra.mxu0 0.0
  %65 = vmatprep.subr.mxu0 0.0
  %66 = vmatpush1.msra.mxu0 0.0
  %67 = vmatprep.subr.mxu0 0.0
  %68 = vmatpush1.msra.mxu0 0.0
  %69 = vmatprep.subr.mxu0 0.0
  %70 = vmatpush1.msra.mxu0 0.0
  %71 = vmatprep.subr.mxu0 0.0
  %72 = vmatpush1.msra.mxu0 0.0
  %73 = vmatprep.subr.mxu0 0.0
  %74 = vmatpush1.msra.mxu0 0.0
  %75 = vmatprep.subr.mxu0 0.0
  %76 = vmatpush1.msra.mxu0 0.0
  %77 = vmatprep.subr.mxu0 0.0
  %78 = vmatpush1.msra.mxu0 0.0
  %79 = vmatprep.subr.mxu0 0.0
  %80 = vmatpush1.msra.mxu0 0.0
  %81 = vmatprep.subr.mxu0 0.0
  %82 = vmatpush1.msra.mxu0 %v57
  %83 = vmatprep.subr.mxu0 0.0
  %84 = vmatpush1.msra.mxu0 %v39
  %85 = vmatprep.subr.mxu0 0.0
  %86 = vmatpush1.msra.mxu0 %v38
  %87 = vmatprep.subr.mxu0 0.0
  %88 = vmatpush1.msra.mxu0 %v37
  %89 = vmatprep.subr.mxu0 0.0
  %90 = vmatpush1.msra.mxu0 %v36
  %91 = vmatprep.subr.mxu0 0.0
  %92 = vmatpush2.msra.mxu0 0.0
  %93 = vmatprep.subr.mxu0 0.0
  %94 = vmatpush2.msra.mxu0 0.0
  %95 = vmatprep.subr.mxu0 0.0
  %96 = vmatpush2.msra.mxu0 0.0
  %97 = vmatprep.subr.mxu0 0.0
  %98 = vmatpush2.msra.mxu0 0.0
  %99 = vmatprep.subr.mxu0 0.0
  %100 = vmatpush2.msra.mxu0 0.0
  %101 = vmatprep.subr.mxu0 0.0
  %102 = vmatpush2.msra.mxu0 0.0
  %103 = vmatprep.subr.mxu0 0.0
  %104 = vmatpush2.msra.mxu0 0.0
  %105 = vmatprep.subr.mxu0 0.0
  %106 = vmatpush2.msra.mxu0 0.0
  %107 = vmatprep.subr.mxu0 0.0
  %108 = vmatpush2.msra.mxu0 0.0
  %109 = vmatprep.subr.mxu0 0.0
  %110 = vmatpush2.msra.mxu0 0.0
  %111 = vmatprep.subr.mxu0 0.0
  %112 = vmatpush2.msra.mxu0 0.0
  %113 = vmatprep.subr.mxu0 0.0
  %114 = vmatpush2.msra.mxu0 0.0
  %115 = vmatprep.subr.mxu0 0.0
  %116 = vmatpush2.msra.mxu0 0.0
  %117 = vmatprep.subr.mxu0 0.0
  %118 = vmatpush2.msra.mxu0 0.0
  %119 = vmatprep.subr.mxu0 0.0
  %120 = vmatpush2.msra.mxu0 0.0
  %121 = vmatprep.subr.mxu0 0.0
  %122 = vmatpush2.msra.mxu0 0.0
  %123 = vmatprep.mubr.f32.mxu0 0.0
  %124 = vmatmul.mubr.f32.gmra.mxu0 %v50
  %v125 = vpop.f32.mrf.mxu0
  %v126 = vadd.f32 %v46, %v125
  %v127 = vpop.f32.mrf.mxu0
  %128 = vmatprep.mubr.f32.mxu0 0.0
  %129 = vmatmul.mubr.f32.gmra.mxu0 %v53
  %v130 = vpop.f32.mrf.mxu0
  %v131 = vadd.f32 %v46, %v130
  %v132 = vpop.f32.mrf.mxu0
  %133 = vdwg.mxu0
  %v134 = vmax.f32 %v126, 0.0
  %v135 = vmax.f32 %v131, 0.0
  %v136 = vld [vmem:[%s3] sm:$0xff]
  %v137 = vld [vmem:[%s3 + $0x8] sm:$0xff]
  %v138 = vld [vmem:[%s3 + $0x10] sm:$0xff]
  %v139 = vld [vmem:[%s3 + $0x18] sm:$0xff]
  %v140 = vld [vmem:[%s4] sm:$0x1]
  %v142 = vlaneseq
  %v143 = vshrl.u32 %v142, 7
  %v144 = vsub.s32 0, %v143
  %v145 = vrot.slane %v140, %v144
  %vm147 = vcmask 261120
  %v149 = vsel %vm147, %v134, 0
  %v152 = vsel %vm147, %v135, 0
  %154 = vmatprep.subr.mxu0 0.0
  %155 = vmatpush1.msra.mxu0 0.0
  %156 = vmatprep.subr.mxu0 0.0
  %157 = vmatpush1.msra.mxu0 0.0
  %158 = vmatprep.subr.mxu0 0.0
  %159 = vmatpush1.msra.mxu0 0.0
  %160 = vmatprep.subr.mxu0 0.0
  %161 = vmatpush1.msra.mxu0 0.0
  %162 = vmatprep.subr.mxu0 0.0
  %163 = vmatpush1.msra.mxu0 0.0
  %164 = vmatprep.subr.mxu0 0.0
  %165 = vmatpush1.msra.mxu0 0.0
  %166 = vmatprep.subr.mxu0 0.0
  %167 = vmatpush1.msra.mxu0 0.0
  %168 = vmatprep.subr.mxu0 0.0
  %169 = vmatpush1.msra.mxu0 0.0
  %170 = vmatprep.subr.mxu0 0.0
  %171 = vmatpush1.msra.mxu0 0.0
  %172 = vmatprep.subr.mxu0 0.0
  %173 = vmatpush1.msra.mxu0 0.0
  %174 = vmatprep.subr.mxu0 0.0
  %175 = vmatpush1.msra.mxu0 0.0
  %176 = vmatprep.subr.mxu0 0.0
  %177 = vmatpush1.msra.mxu0 0.0
  %178 = vmatprep.subr.mxu0 0.0
  %179 = vmatpush1.msra.mxu0 %v139
  %180 = vmatprep.subr.mxu0 0.0
  %181 = vmatpush1.msra.mxu0 %v138
  %182 = vmatprep.subr.mxu0 0.0
  %183 = vmatpush1.msra.mxu0 %v137
  %184 = vmatprep.subr.mxu0 0.0
  %185 = vmatpush1.msra.mxu0 %v136
  %186 = vmatprep.subr.mxu0 0.0
  %187 = vmatpush2.msra.mxu0 0.0
  %188 = vmatprep.subr.mxu0 0.0
  %189 = vmatpush2.msra.mxu0 0.0
  %190 = vmatprep.subr.mxu0 0.0
  %191 = vmatpush2.msra.mxu0 0.0
  %192 = vmatprep.subr.mxu0 0.0
  %193 = vmatpush2.msra.mxu0 0.0
  %194 = vmatprep.subr.mxu0 0.0
  %195 = vmatpush2.msra.mxu0 0.0
  %196 = vmatprep.subr.mxu0 0.0
  %197 = vmatpush2.msra.mxu0 0.0
  %198 = vmatprep.subr.mxu0 0.0
  %199 = vmatpush2.msra.mxu0 0.0
  %200 = vmatprep.subr.mxu0 0.0
  %201 = vmatpush2.msra.mxu0 0.0
  %202 = vmatprep.subr.mxu0 0.0
  %203 = vmatpush2.msra.mxu0 0.0
  %204 = vmatprep.subr.mxu0 0.0
  %205 = vmatpush2.msra.mxu0 0.0
  %206 = vmatprep.subr.mxu0 0.0
  %207 = vmatpush2.msra.mxu0 0.0
  %208 = vmatprep.subr.mxu0 0.0
  %209 = vmatpush2.msra.mxu0 0.0
  %210 = vmatprep.subr.mxu0 0.0
  %211 = vmatpush2.msra.mxu0 0.0
  %212 = vmatprep.subr.mxu0 0.0
  %213 = vmatpush2.msra.mxu0 0.0
  %214 = vmatprep.subr.mxu0 0.0
  %215 = vmatpush2.msra.mxu0 0.0
  %216 = vmatprep.subr.mxu0 0.0
  %217 = vmatpush2.msra.mxu0 0.0
  %218 = vmatprep.mubr.f32.mxu0 0.0
  %219 = vmatmul.mubr.f32.gmra.mxu0 %v149
  %v220 = vpop.f32.mrf.mxu0
  %v221 = vadd.f32 %v145, %v220
  %v222 = vpop.f32.mrf.mxu0
  %223 = vmatprep.mubr.f32.mxu0 0.0
  %224 = vmatmul.mubr.f32.gmra.mxu0 %v152
  %v225 = vpop.f32.mrf.mxu0
  %v226 = vadd.f32 %v145, %v225
  %v227 = vpop.f32.mrf.mxu0
  %228 = vdwg.mxu0
  %v229 = vmax.f32 %v221, 0.0
  %v230 = vmax.f32 %v226, 0.0
  %v231 = vld [vmem:[%s5] sm:$0xff]
  %v232 = vld [vmem:[%s5 + $0x8] sm:$0xff]
  %v233 = vld [vmem:[%s6] sm:$0x1]
  %v235 = vlaneseq
  %v236 = vshrl.u32 %v235, 7
  %v237 = vsub.s32 0, %v236
  %v238 = vrot.slane %v233, %v237
  %vm240 = vcmask 130048
  %v242 = vsel %vm240, %v229, 0
  %v245 = vsel %vm240, %v230, 0
  %247 = vmatprep.subr.mxu0 0.0
  %248 = vmatpush1.msra.mxu0 0.0
  %249 = vmatprep.subr.mxu0 0.0
  %250 = vmatpush1.msra.mxu0 0.0
  %251 = vmatprep.subr.mxu0 0.0
  %252 = vmatpush1.msra.mxu0 0.0
  %253 = vmatprep.subr.mxu0 0.0
  %254 = vmatpush1.msra.mxu0 0.0
  %255 = vmatprep.subr.mxu0 0.0
  %256 = vmatpush1.msra.mxu0 0.0
  %257 = vmatprep.subr.mxu0 0.0
  %258 = vmatpush1.msra.mxu0 0.0
  %259 = vmatprep.subr.mxu0 0.0
  %260 = vmatpush1.msra.mxu0 0.0
  %261 = vmatprep.subr.mxu0 0.0
  %262 = vmatpush1.msra.mxu0 0.0
  %263 = vmatprep.subr.mxu0 0.0
  %264 = vmatpush1.msra.mxu0 0.0
  %265 = vmatprep.subr.mxu0 0.0
  %266 = vmatpush1.msra.mxu0 0.0
  %267 = vmatprep.subr.mxu0 0.0
  %268 = vmatpush1.msra.mxu0 0.0
  %269 = vmatprep.subr.mxu0 0.0
  %270 = vmatpush1.msra.mxu0 0.0
  %271 = vmatprep.subr.mxu0 0.0
  %272 = vmatpush1.msra.mxu0 0.0
  %273 = vmatprep.subr.mxu0 0.0
  %274 = vmatpush1.msra.mxu0 0.0
  %275 = vmatprep.subr.mxu0 0.0
  %276 = vmatpush1.msra.mxu0 %v232
  %277 = vmatprep.subr.mxu0 0.0
  %278 = vmatpush1.msra.mxu0 %v231
  %279 = vmatprep.subr.mxu0 0.0
  %280 = vmatpush2.msra.mxu0 0.0
  %281 = vmatprep.subr.mxu0 0.0
  %282 = vmatpush2.msra.mxu0 0.0
  %283 = vmatprep.subr.mxu0 0.0
  %284 = vmatpush2.msra.mxu0 0.0
  %285 = vmatprep.subr.mxu0 0.0
  %286 = vmatpush2.msra.mxu0 0.0
  %287 = vmatprep.subr.mxu0 0.0
  %288 = vmatpush2.msra.mxu0 0.0
  %289 = vmatprep.subr.mxu0 0.0
  %290 = vmatpush2.msra.mxu0 0.0
  %291 = vmatprep.subr.mxu0 0.0
  %292 = vmatpush2.msra.mxu0 0.0
  %293 = vmatprep.subr.mxu0 0.0
  %294 = vmatpush2.msra.mxu0 0.0
  %295 = vmatprep.subr.mxu0 0.0
  %296 = vmatpush2.msra.mxu0 0.0
  %297 = vmatprep.subr.mxu0 0.0
  %298 = vmatpush2.msra.mxu0 0.0
  %299 = vmatprep.subr.mxu0 0.0
  %300 = vmatpush2.msra.mxu0 0.0
  %301 = vmatprep.subr.mxu0 0.0
  %302 = vmatpush2.msra.mxu0 0.0
  %303 = vmatprep.subr.mxu0 0.0
  %304 = vmatpush2.msra.mxu0 0.0
  %305 = vmatprep.subr.mxu0 0.0
  %306 = vmatpush2.msra.mxu0 0.0
  %307 = vmatprep.subr.mxu0 0.0
  %308 = vmatpush2.msra.mxu0 0.0
  %309 = vmatprep.subr.mxu0 0.0
  %310 = vmatpush2.msra.mxu0 0.0
  %311 = vmatprep.mubr.f32.mxu0 0.0
  %312 = vmatmul.mubr.f32.gmra.mxu0 %v242
  %v313 = vpop.f32.mrf.mxu0
  %v314 = vadd.f32 %v238, %v313
  %v315 = vpop.f32.mrf.mxu0
  %316 = vmatprep.mubr.f32.mxu0 0.0
  %317 = vmatmul.mubr.f32.gmra.mxu0 %v245
  %v318 = vpop.f32.mrf.mxu0
  %v319 = vadd.f32 %v238, %v318
  %v320 = vpop.f32.mrf.mxu0
  %321 = vdwg.mxu0
  %v322 = vmax.f32 %v314, 0.0
  %v323 = vmax.f32 %v319, 0.0
  %v324 = vld [vmem:[%s7] sm:$0xff]
  %v325 = vld [vmem:[#allocation2] sm:$0x1]
  %v327 = vlaneseq
  %v328 = vshrl.u32 %v327, 7
  %v329 = vsub.s32 0, %v328
  %v330 = vrot.slane %v325, %v329
  %vm332 = vcmask 64512
  %v334 = vsel %vm332, %v322, 0
  %v337 = vsel %vm332, %v323, 0
  %339 = vmatprep.subr.mxu0 0.0
  %340 = vmatpush1.msra.mxu0 0.0
  %341 = vmatprep.subr.mxu0 0.0
  %342 = vmatpush1.msra.mxu0 0.0
  %343 = vmatprep.subr.mxu0 0.0
  %344 = vmatpush1.msra.mxu0 0.0
  %345 = vmatprep.subr.mxu0 0.0
  %346 = vmatpush1.msra.mxu0 0.0
  %347 = vmatprep.subr.mxu0 0.0
  %348 = vmatpush1.msra.mxu0 0.0
  %349 = vmatprep.subr.mxu0 0.0
  %350 = vmatpush1.msra.mxu0 0.0
  %351 = vmatprep.subr.mxu0 0.0
  %352 = vmatpush1.msra.mxu0 0.0
  %353 = vmatprep.subr.mxu0 0.0
  %354 = vmatpush1.msra.mxu0 0.0
  %355 = vmatprep.subr.mxu0 0.0
  %356 = vmatpush1.msra.mxu0 0.0
  %357 = vmatprep.subr.mxu0 0.0
  %358 = vmatpush1.msra.mxu0 0.0
  %359 = vmatprep.subr.mxu0 0.0
  %360 = vmatpush1.msra.mxu0 0.0
  %361 = vmatprep.subr.mxu0 0.0
  %362 = vmatpush1.msra.mxu0 0.0
  %363 = vmatprep.subr.mxu0 0.0
  %364 = vmatpush1.msra.mxu0 0.0
  %365 = vmatprep.subr.mxu0 0.0
  %366 = vmatpush1.msra.mxu0 0.0
  %367 = vmatprep.subr.mxu0 0.0
  %368 = vmatpush1.msra.mxu0 0.0
  %369 = vmatprep.subr.mxu0 0.0
  %370 = vmatpush1.msra.mxu0 %v324
  %371 = vmatprep.subr.mxu0 0.0
  %372 = vmatpush2.msra.mxu0 0.0
  %373 = vmatprep.subr.mxu0 0.0
  %374 = vmatpush2.msra.mxu0 0.0
  %375 = vmatprep.subr.mxu0 0.0
  %376 = vmatpush2.msra.mxu0 0.0
  %377 = vmatprep.subr.mxu0 0.0
  %378 = vmatpush2.msra.mxu0 0.0
  %379 = vmatprep.subr.mxu0 0.0
  %380 = vmatpush2.msra.mxu0 0.0
  %381 = vmatprep.subr.mxu0 0.0
  %382 = vmatpush2.msra.mxu0 0.0
  %383 = vmatprep.subr.mxu0 0.0
  %384 = vmatpush2.msra.mxu0 0.0
  %385 = vmatprep.subr.mxu0 0.0
  %386 = vmatpush2.msra.mxu0 0.0
  %387 = vmatprep.subr.mxu0 0.0
  %388 = vmatpush2.msra.mxu0 0.0
  %389 = vmatprep.subr.mxu0 0.0
  %390 = vmatpush2.msra.mxu0 0.0
  %391 = vmatprep.subr.mxu0 0.0
  %392 = vmatpush2.msra.mxu0 0.0
  %393 = vmatprep.subr.mxu0 0.0
  %394 = vmatpush2.msra.mxu0 0.0
  %395 = vmatprep.subr.mxu0 0.0
  %396 = vmatpush2.msra.mxu0 0.0
  %397 = vmatprep.subr.mxu0 0.0
  %398 = vmatpush2.msra.mxu0 0.0
  %399 = vmatprep.subr.mxu0 0.0
  %400 = vmatpush2.msra.mxu0 0.0
  %401 = vmatprep.subr.mxu0 0.0
  %402 = vmatpush2.msra.mxu0 0.0
  %403 = vmatprep.mubr.f32.mxu0 0.0
  %404 = vmatmul.mubr.f32.gmra.mxu0 %v334
  %v405 = vpop.f32.mrf.mxu0
  %v406 = vadd.f32 %v330, %v405
  %v407 = vpop.f32.mrf.mxu0
  %408 = vmatprep.mubr.f32.mxu0 0.0
  %409 = vmatmul.mubr.f32.gmra.mxu0 %v337
  %v410 = vpop.f32.mrf.mxu0
  %v411 = vadd.f32 %v330, %v410
  %v412 = vpop.f32.mrf.mxu0
  %413 = vdwg.mxu0
  %v414 = vxor.u32 %v406, 2147483648
  %v415 = vxor.u32 %v411, 2147483648
  %v416 = vmul.f32 %v414, 1.442695
  %v417 = vpow.pop %v416
  %v418 = vmul.f32 %v415, 1.442695
  %v419 = vpow.pop %v418
  %v420 = vadd.f32 %v417, 1.0
  %v421 = vadd.f32 %v419, 1.0
  %v422 = vrcp.pop %v420
  %v423 = vmul.f32 1.0, %v422
  %v424 = vrcp.pop %v421
  %v425 = vmul.f32 1.0, %v424
  %v426 = vlaneseq
  %v427 = vand.u32 %v426, 127
  %vm428 = vcmp.eq.s32.totalorder %v427, 1
  %v429 = vsub.f32 1.0, %v423
  %v430 = vsub.f32 1.0, %v425
  %432 = vset.pattern.permute.xlu0 0
  %433 = vperm.xlu0 %432, %v423
  %v434 = vpop.permute.xlu0 %433
  %437 = vset.pattern.permute.xlu0 0
  %438 = vperm.xlu0 %437, %v425
  %v439 = vpop.permute.xlu0 %438
  %442 = vset.pattern.permute.xlu0 0
  %443 = vperm.xlu0 %442, %v429
  %v444 = vpop.permute.xlu0 %443
  %447 = vset.pattern.permute.xlu0 0
  %448 = vperm.xlu0 %447, %v430
  %v449 = vpop.permute.xlu0 %448
  %v451 = vsel %vm428, %v434, %v444
  %v452 = vsel %vm428, %v439, %v449
  %vm453 = vcmask 15360
  %454 = vst.msk [vmem:[%s9] sm:$0xff] %vm453, %v451
  %455 = vst.msk [vmem:[%s9 + $0x8] sm:$0xff] %vm453, %v452
  // Predicated region
  $region38: #{ported_mlp_classifier.1} parent=0 // pred_check
    _
  $region39: #{ported_mlp_classifier.1} parent=0 // pred_check_branch
    %457 = sbr.rel (0) target = $region41
  $region40: #{ported_mlp_classifier.1} parent=0 // pred_region
    _
  $region41: #{ported_mlp_classifier.1} parent=0 // pred_fallthru
    _
  // Predicated region
  $region42: #{ported_mlp_classifier.1} parent=0 // pred_check
    _
  $region43: #{ported_mlp_classifier.1} parent=0 // pred_check_branch
    %459 = sbr.rel (0) target = $region45
  $region44: #{ported_mlp_classifier.1} parent=0 // pred_region
    _
  $region45: #{ported_mlp_classifier.1} parent=0 // pred_fallthru
    _

</llo_original>
